<compile_context>
chip_gen: v5e
topology: v5e:2x2
jax: 0.10.0
libtpu: 0.0.40
codegen_flags: <defaults>
</compile_context>

<pallas_src>
import functools
import math

import jax
import jax.numpy as jnp
from jax.experimental import pallas as pl
from jax.experimental.pallas import tpu as pltpu


def _round_up(x: int, m: int) -> int:
    return (x + m - 1) // m * m


def _pick_tile(dim_p: int, requested: int, unit: int) -> int:
    """Largest multiple-of-`unit` divisor of dim_p that is <= requested (>= unit)."""
    cap = max(unit, min(requested, dim_p))
    best = unit
    d = unit
    while d <= cap:
        if dim_p % d == 0:
            best = d
        d += unit
    return best


def _mfvi_kernel(x_ref, wm_ref, wv_ref, eps_w_ref, bm_ref, bv_ref, eps_b_ref,
                 o_ref, *, compute_dtype):
    """One (tm, tn) output tile, accumulated over the k (In) grid axis in o_ref itself."""
    k = pl.program_id(2)

    @pl.when(k == 0)
    def _init():
        o_ref[...] = jnp.zeros_like(o_ref)

    # Reparameterized weight tile, already (K, N)-oriented. Params may stream as bf16;
    # the exp/reparameterization is always done in f32.
    w_eff = (wm_ref[...].astype(jnp.float32)
             + jnp.exp(0.5 * wv_ref[...].astype(jnp.float32))
             * eps_w_ref[...].astype(jnp.float32))                     # (tk, tn) f32

    o_ref[...] += jnp.dot(
        x_ref[...],                                                    # already compute_dtype
        w_eff.astype(compute_dtype),
        preferred_element_type=jnp.float32,
    )

    @pl.when(k == pl.num_programs(2) - 1)
    def _finalize():
        bias = (bm_ref[...].astype(jnp.float32)
                + jnp.exp(0.5 * bv_ref[...].astype(jnp.float32))
                * eps_b_ref[...].astype(jnp.float32))                  # (1, tn) f32
        o_ref[...] += bias


def mfvi_forward(x, w_m, w_v, b_m, b_v, *, eps_w=None, eps_b=None, key=None,
                 tm=512, tn=512, tk=1024,
                 param_dtype=jnp.float32, matmul_dtype=None):
    """MFVI linear forward.

    x: (B, In); w_m/w_v: (Out, In); b_m/b_v: (Out,).
    Either pass eps_w (Out, In) and eps_b (Out,) explicitly (bit-checkable), or pass a
    jax.random `key` to draw fresh reparameterization noise for this call (the PyTorch
    forward draws new noise on every call).
    param_dtype: dtype the posterior params / eps are streamed from HBM in (f32 exact,
    bf16 halves the dominant weight-stream bytes in the bandwidth-bound regime).
    """
    B, In = x.shape
    Out = w_m.shape[0]

    if eps_w is None:
        if key is None:
            raise ValueError("provide either eps_w/eps_b or a jax.random key")
        k_w, k_b = jax.random.split(key)
        eps_w = jax.random.normal(k_w, (Out, In), dtype=jnp.float32)
        eps_b = jax.random.normal(k_b, (Out,), dtype=jnp.float32)
    elif eps_b is None:
        raise ValueError("eps_b must be provided together with eps_w")

    if matmul_dtype is None:
        # bf16 MXU operands only when weights already stream as bf16 (so numerics were
        # already relaxed) or when B is large enough to actually be compute-bound.
        matmul_dtype = (jnp.bfloat16
                        if (jnp.dtype(param_dtype) == jnp.dtype(jnp.bfloat16) or B >= 2048)
                        else jnp.float32)

    # ---- Padding / tile selection -------------------------------------------------
    # Lane dims -> multiples of 128, sublane (batch) -> multiple of 8. Tiles are chosen
    # as divisors of the padded dims so no extra zero-padding is streamed.
    B_p = _round_up(B, 8)
    In_p = _round_up(In, 128)
    Out_p = _round_up(Out, 128)

    tm = _pick_tile(B_p, tm, 8)
    tk = _pick_tile(In_p, tk, 128)
    # Guarantee >=2 Out tiles when possible so v7x's two TensorCores both get work.
    tn_cap = tn if Out_p < 256 else min(tn, Out_p // 2)
    tn = _pick_tile(Out_p, tn_cap, 128)

    n_m = B_p // tm
    n_n = Out_p // tn
    n_k = In_p // tk

    f32 = jnp.float32

    def pad2(a, rows, cols, dtype):
        a = a.astype(f32)
        a = jnp.pad(a, ((0, rows - a.shape[0]), (0, cols - a.shape[1])))
        return a.astype(dtype)

    # Cast x to the matmul dtype once here (not per grid step inside the kernel).
    x_p = pad2(x, B_p, In_p, matmul_dtype)
    # TODO(synk): in a real VCL model store the posterior as (In, Out) to avoid this
    # per-call wrapper transpose; it is one-time layout plumbing, not kernel compute.
    # TODO(synk): if many MC samples reuse the same posterior, precompute
    # sigma = exp(0.5*W_v) once and feed it instead of W_v to drop the per-call EUP exp.
    wt_m = pad2(w_m.T, In_p, Out_p, param_dtype)
    wt_v = pad2(w_v.T, In_p, Out_p, param_dtype)
    eps_wt = pad2(eps_w.T, In_p, Out_p, param_dtype)
    b_m2 = pad2(b_m.reshape(1, Out), 1, Out_p, param_dtype)
    b_v2 = pad2(b_v.reshape(1, Out), 1, Out_p, param_dtype)
    eps_b2 = pad2(eps_b.reshape(1, Out), 1, Out_p, param_dtype)

    x_spec = pl.BlockSpec((tm, tk), lambda m, n, k: (m, k))
    w_spec = pl.BlockSpec((tk, tn), lambda m, n, k: (k, n))
    b_spec = pl.BlockSpec((1, tn), lambda m, n, k: (0, n))
    out_spec = pl.BlockSpec((tm, tn), lambda m, n, k: (m, n))

    x_bytes = jnp.dtype(matmul_dtype).itemsize
    w_bytes = jnp.dtype(param_dtype).itemsize

    # VMEM footprint of one pipelined step (all streams double-buffered) + 50% margin.
    block_bytes = (2 * tm * tk * x_bytes           # x
                   + 2 * 3 * tk * tn * w_bytes     # w_m, w_v, eps_w
                   + 2 * 3 * 8 * tn * w_bytes      # bias rows (sublane-padded)
                   + 2 * tm * tn * 4)              # output / accumulator
    vmem_limit = int(min(max(block_bytes * 3 // 2, 32 << 20), 96 << 20))

    # Real HBM traffic: x re-read per Out tile, weights/eps re-read per batch tile.
    cost = pl.CostEstimate(
        flops=2 * B_p * In_p * Out_p,
        transcendentals=n_m * In_p * Out_p + n_m * Out_p,
        bytes_accessed=(n_n * B_p * In_p * x_bytes
                        + n_m * 3 * In_p * Out_p * w_bytes
                        + n_m * 3 * Out_p * w_bytes
                        + B_p * Out_p * 4),
    )

    out_p = pl.pallas_call(
        functools.partial(_mfvi_kernel, compute_dtype=matmul_dtype),
        out_shape=jax.ShapeDtypeStruct((B_p, Out_p), f32),
        grid_spec=pltpu.PrefetchScalarGridSpec(
            num_scalar_prefetch=0,
            grid=(n_m, n_n, n_k),
            in_specs=[x_spec, w_spec, w_spec, w_spec, b_spec, b_spec, b_spec],
            out_specs=out_spec,
        ),
        compiler_params=pltpu.CompilerParams(
            dimension_semantics=("parallel", "parallel", "arbitrary"),
            vmem_limit_bytes=vmem_limit,
        ),
        cost_estimate=cost,
    )(x_p, wt_m, wt_v, eps_wt, b_m2, b_v2, eps_b2)

    return out_p[:B, :Out]


def mfvi_reference(x, w_m, w_v, eps_w, b_m, b_v, eps_b):
    """Pure-JAX reference for correctness checking."""
    w_eff = w_m + jnp.exp(0.5 * w_v) * eps_w
    b_eff = b_m + jnp.exp(0.5 * b_v) * eps_b
    return x @ w_eff.T + b_eff


if __name__ == "__main__":
    key = jax.random.PRNGKey(0)
    k_x, k_wm, k_bm, k_ew, k_eb, k_noise = jax.random.split(key, 6)

    batch, input_size, output_size = 8, 32, 64

    # Deterministic parameter init, mirroring the PyTorch __init__.
    w_m = 0.001 * jax.random.normal(k_wm, (output_size, input_size), dtype=jnp.float32)
    b_m = 0.001 * jax.random.normal(k_bm, (output_size,), dtype=jnp.float32)
    w_v = jnp.full((output_size, input_size), math.log(1e-6), dtype=jnp.float32)
    b_v = jnp.full((output_size,), math.log(1e-6), dtype=jnp.float32)

    # Input and reparameterization noise (torch.normal(0, 1, ...) in the original forward).
    x = jax.random.normal(k_x, (batch, input_size), dtype=jnp.float32)
    eps_w = jax.random.normal(k_ew, (output_size, input_size), dtype=jnp.float32)
    eps_b = jax.random.normal(k_eb, (output_size,), dtype=jnp.float32)

    ref = mfvi_reference(x, w_m, w_v, eps_w, b_m, b_v, eps_b)

    # --- Path 1: explicit eps, f32 streaming -> exact check against the reference.
    out = mfvi_forward(x, w_m, w_v, b_m, b_v, eps_w=eps_w, eps_b=eps_b)
    out = jax.block_until_ready(out)
    assert out.shape == (batch, output_size)
    assert jnp.allclose(out, ref, atol=1e-5, rtol=1e-5), "f32 path mismatch vs reference"

    # --- Path 2: bf16 param streaming (bandwidth-bound fast path), loose tolerance.
    out_bf16 = mfvi_forward(x, w_m, w_v, b_m, b_v, eps_w=eps_w, eps_b=eps_b,
                            param_dtype=jnp.bfloat16)
    out_bf16 = jax.block_until_ready(out_bf16)
    assert out_bf16.shape == (batch, output_size)
    assert jnp.allclose(out_bf16, ref, atol=5e-3), "bf16-stream path too far from reference"

    # --- Path 3: fresh noise drawn from a key (per-call sampling like the PyTorch forward).
    out_s = mfvi_forward(x, w_m, w_v, b_m, b_v, key=k_noise)
    out_s = jax.block_until_ready(out_s)
    assert out_s.shape == (batch, output_size)
    # sigma = exp(0.5*log(1e-6)) = 1e-3, so the sample must sit within a few-sigma band of
    # the posterior-mean forward, but not coincide with it.
    mean_out = x @ w_m.T + b_m
    max_dev = float(jnp.max(jnp.abs(out_s - mean_out)))
    assert max_dev < 0.1, f"sampled output too far from posterior mean ({max_dev})"
    assert max_dev > 1e-5, "sampled output carries no noise"

    # Note: the PyTorch forward also does `print(self.posterior_W_v)`; that is host-side
    # logging, not kernel compute, so it is intentionally omitted from the kernel.
    print("KERNEL_OK")
</pallas_src>

<mosaic_0001>
module attributes {stable_mosaic.version = 11 : i64} {
  func.func @_mfvi_kernel(%arg0: i32, %arg1: i32, %arg2: i32, %arg3: memref<8x128xf32, #tpu.memory_space<vmem>>, %arg4: memref<128x128xf32, #tpu.memory_space<vmem>>, %arg5: memref<128x128xf32, #tpu.memory_space<vmem>>, %arg6: memref<128x128xf32, #tpu.memory_space<vmem>>, %arg7: memref<1x128xf32, #tpu.memory_space<vmem>>, %arg8: memref<1x128xf32, #tpu.memory_space<vmem>>, %arg9: memref<1x128xf32, #tpu.memory_space<vmem>>, %arg10: memref<8x128xf32, #tpu.memory_space<vmem>>) attributes {dimension_semantics = [#tpu.dimension_semantics<parallel>, #tpu.dimension_semantics<parallel>, #tpu.dimension_semantics<arbitrary>], iteration_bounds = array<i64: 1, 1, 1>, scalar_prefetch = 0 : i64, scratch_operands = 0 : i64, tpu.core_type = #tpu.core_type<tc>, window_params = [{transform_indices = @transform_0, window_bounds = array<i64: 8, 128>}, {transform_indices = @transform_1, window_bounds = array<i64: 128, 128>}, {transform_indices = @transform_2, window_bounds = array<i64: 128, 128>}, {transform_indices = @transform_3, window_bounds = array<i64: 128, 128>}, {transform_indices = @transform_4, window_bounds = array<i64: 1, 128>}, {transform_indices = @transform_5, window_bounds = array<i64: 1, 128>}, {transform_indices = @transform_6, window_bounds = array<i64: 1, 128>}, {transform_indices = @transform_7, window_bounds = array<i64: 8, 128>}]} {
    %c0_i32 = arith.constant 0 : i32
    %0 = arith.cmpi eq, %arg2, %c0_i32 : i32
    %1 = arith.extui %0 : i1 to i32
    %c0_i32_0 = arith.constant 0 : i32
    %2 = arith.cmpi ne, %1, %c0_i32_0 : i32
    scf.if %2 {
      %cst_15 = arith.constant 0.000000e+00 : f32
      %19 = vector.broadcast %cst_15 : f32 to vector<8x128xf32>
      %c0_16 = arith.constant 0 : index
      %c0_17 = arith.constant 0 : index
      %20 = vector.load %arg10[%c0_16, %c0_17] : memref<8x128xf32, #tpu.memory_space<vmem>>, vector<8x128xf32>
      tpu.vector_store %arg10[%c0_16, %c0_17], %19 {strides = array<i32>} : memref<8x128xf32, #tpu.memory_space<vmem>>, vector<8x128xf32>,
    } else {
    }
    %c0 = arith.constant 0 : index
    %c0_1 = arith.constant 0 : index
    %3 = vector.load %arg4[%c0, %c0_1] : memref<128x128xf32, #tpu.memory_space<vmem>>, vector<128x128xf32>
    %c0_2 = arith.constant 0 : index
    %c0_3 = arith.constant 0 : index
    %4 = vector.load %arg5[%c0_2, %c0_3] : memref<128x128xf32, #tpu.memory_space<vmem>>, vector<128x128xf32>
    %cst = arith.constant 5.000000e-01 : f32
    %5 = vector.broadcast %cst : f32 to vector<128x128xf32>
    %6 = arith.mulf %5, %4 : vector<128x128xf32>
    %7 = math.exp %6 : vector<128x128xf32>
    %c0_4 = arith.constant 0 : index
    %c0_5 = arith.constant 0 : index
    %8 = vector.load %arg6[%c0_4, %c0_5] : memref<128x128xf32, #tpu.memory_space<vmem>>, vector<128x128xf32>
    %9 = arith.mulf %7, %8 : vector<128x128xf32>
    %10 = arith.addf %3, %9 : vector<128x128xf32>
    %c0_6 = arith.constant 0 : index
    %c0_7 = arith.constant 0 : index
    %11 = vector.load %arg10[%c0_6, %c0_7] : memref<8x128xf32, #tpu.memory_space<vmem>>, vector<8x128xf32>
    %c0_8 = arith.constant 0 : index
    %c0_9 = arith.constant 0 : index
    %12 = vector.load %arg3[%c0_8, %c0_9] : memref<8x128xf32, #tpu.memory_space<vmem>>, vector<8x128xf32>
    %cst_10 = arith.constant dense<0.000000e+00> : vector<8x128xf32>
    %13 = tpu.matmul %12, %10, %cst_10 {dimension_numbers = #tpu.dot_dimension_numbers<[1], [0], [0], [1], [0, 0, 1, 1], [], []>} : vector<8x128xf32>, vector<128x128xf32>, vector<8x128xf32> -> vector<8x128xf32>
    %14 = arith.addf %11, %13 : vector<8x128xf32>
    %c0_11 = arith.constant 0 : index
    %c0_12 = arith.constant 0 : index
    %15 = vector.load %arg10[%c0_11, %c0_12] : memref<8x128xf32, #tpu.memory_space<vmem>>, vector<8x128xf32>
    tpu.vector_store %arg10[%c0_11, %c0_12], %14 {strides = array<i32>} : memref<8x128xf32, #tpu.memory_space<vmem>>, vector<8x128xf32>,
    %c0_i32_13 = arith.constant 0 : i32
    %16 = arith.cmpi eq, %arg2, %c0_i32_13 : i32
    %17 = arith.extui %16 : i1 to i32
    %c0_i32_14 = arith.constant 0 : i32
    %18 = arith.cmpi ne, %17, %c0_i32_14 : i32
    scf.if %18 {
      %c0_15 = arith.constant 0 : index
      %c0_16 = arith.constant 0 : index
      %19 = vector.load %arg7[%c0_15, %c0_16] : memref<1x128xf32, #tpu.memory_space<vmem>>, vector<1x128xf32>
      %c0_17 = arith.constant 0 : index
      %c0_18 = arith.constant 0 : index
      %20 = vector.load %arg8[%c0_17, %c0_18] : memref<1x128xf32, #tpu.memory_space<vmem>>, vector<1x128xf32>
      %cst_19 = arith.constant 5.000000e-01 : f32
      %21 = vector.broadcast %cst_19 : f32 to vector<1x128xf32>
      %22 = arith.mulf %21, %20 : vector<1x128xf32>
      %23 = math.exp %22 : vector<1x128xf32>
      %c0_20 = arith.constant 0 : index
      %c0_21 = arith.constant 0 : index
      %24 = vector.load %arg9[%c0_20, %c0_21] : memref<1x128xf32, #tpu.memory_space<vmem>>, vector<1x128xf32>
      %25 = arith.mulf %23, %24 : vector<1x128xf32>
      %26 = arith.addf %19, %25 : vector<1x128xf32>
      %c0_22 = arith.constant 0 : index
      %c0_23 = arith.constant 0 : index
      %27 = vector.load %arg10[%c0_22, %c0_23] : memref<8x128xf32, #tpu.memory_space<vmem>>, vector<8x128xf32>
      %28 = vector.broadcast %26 : vector<1x128xf32> to vector<8x128xf32>
      %29 = arith.addf %27, %28 : vector<8x128xf32>
      %c0_24 = arith.constant 0 : index
      %c0_25 = arith.constant 0 : index
      %30 = vector.load %arg10[%c0_24, %c0_25] : memref<8x128xf32, #tpu.memory_space<vmem>>, vector<8x128xf32>
      tpu.vector_store %arg10[%c0_24, %c0_25], %29 {strides = array<i32>} : memref<8x128xf32, #tpu.memory_space<vmem>>, vector<8x128xf32>,
    } else {
    }
    return
  }
  func.func @transform_0(%arg0: i32, %arg1: i32, %arg2: i32) -> (i32, i32) {
    %c0_i32 = arith.constant 0 : i32
    return %arg0, %arg2 : i32, i32
  }
  func.func @transform_1(%arg0: i32, %arg1: i32, %arg2: i32) -> (i32, i32) {
    %c0_i32 = arith.constant 0 : i32
    return %arg2, %arg1 : i32, i32
  }
  func.func @transform_2(%arg0: i32, %arg1: i32, %arg2: i32) -> (i32, i32) {
    %c0_i32 = arith.constant 0 : i32
    return %arg2, %arg1 : i32, i32
  }
  func.func @transform_3(%arg0: i32, %arg1: i32, %arg2: i32) -> (i32, i32) {
    %c0_i32 = arith.constant 0 : i32
    return %arg2, %arg1 : i32, i32
  }
  func.func @transform_4(%arg0: i32, %arg1: i32, %arg2: i32) -> (i32, i32) {
    %c0_i32 = arith.constant 0 : i32
    %c0_i32_0 = arith.constant 0 : i32
    return %c0_i32, %arg1 : i32, i32
  }
  func.func @transform_5(%arg0: i32, %arg1: i32, %arg2: i32) -> (i32, i32) {
    %c0_i32 = arith.constant 0 : i32
    %c0_i32_0 = arith.constant 0 : i32
    return %c0_i32, %arg1 : i32, i32
  }
  func.func @transform_6(%arg0: i32, %arg1: i32, %arg2: i32) -> (i32, i32) {
    %c0_i32 = arith.constant 0 : i32
    %c0_i32_0 = arith.constant 0 : i32
    return %c0_i32, %arg1 : i32, i32
  }
  func.func @transform_7(%arg0: i32, %arg1: i32, %arg2: i32) -> (i32, i32) {
    %c0_i32 = arith.constant 0 : i32
    return %arg0, %arg1 : i32, i32
  }
}

</mosaic_0001>

<llo_original>
// kernel: tpu_custom_call.1
$region0: #{tpu_custom_call.1}
  #allocation0 [shape = 'u32[]', space=smem, size = 0x4, offset = 0x4, fixed_abs, tag = 'smem constant byte address 0x4 - core index']
  #allocation1 [shape = 'u32[72,128]{1,0:T(1,128)}', space=vmem, size = 0x9000, scoped, tag = 'internal scratch']
  %s0 = inlined_call_operand.hbm [shape: f32[8,128], index: 0, kind: input, shape index: {}]
  %s1 = inlined_call_operand.hbm [shape: f32[128,128], index: 1, kind: input, shape index: {}]
  %s2 = inlined_call_operand.hbm [shape: f32[128,128], index: 2, kind: input, shape index: {}]
  %s3 = inlined_call_operand.hbm [shape: f32[128,128], index: 3, kind: input, shape index: {}]
  %s4 = inlined_call_operand.vmem [shape: f32[1,128], index: 4, kind: input, shape index: {}]
  %s5 = inlined_call_operand.vmem [shape: f32[1,128], index: 5, kind: input, shape index: {}]
  %s6 = inlined_call_operand.vmem [shape: f32[1,128], index: 6, kind: input, shape index: {}]
  %s7 = inlined_call_operand.hbm [shape: f32[8,128], index: 7, kind: output, shape index: {}]
  %s8 = sld [smem:[#allocation0]]
  $region62: #{tpu_custom_call.1} parent=0
    _
  %s10 = ssub.s32 1, %s8
  %s11 = scalar_select 0, %s10, %s8
  $region1: #{tpu_custom_call.1} parent=0
    #allocation2 [shape = 'u8[4096]{0}', space=vmem, size = 0x1000, scoped, tag = 'input window, operand 0, single buffered']
    #allocation3 [shape = 's32[1]{0}', space=sflag, size = 0x4, scoped, tag = 'scoped memory for tpu_custom_call.1']
    #allocation4 [shape = 's32[1]{0}', space=sflag, size = 0x4, scoped, tag = 'scoped memory for tpu_custom_call.1']
    #allocation5 [shape = 'u8[65536]{0}', space=vmem, size = 0x10000, scoped, tag = 'input window, operand 1, single buffered']
    #allocation6 [shape = 's32[1]{0}', space=sflag, size = 0x4, scoped, tag = 'scoped memory for tpu_custom_call.1']
    #allocation7 [shape = 'u8[65536]{0}', space=vmem, size = 0x10000, scoped, tag = 'input window, operand 2, single buffered']
    #allocation8 [shape = 'u8[65536]{0}', space=vmem, size = 0x10000, scoped, tag = 'input window, operand 3, single buffered']
    #allocation9 [shape = 's32[1]{0}', space=sflag, size = 0x4, scoped, tag = 'scoped memory for tpu_custom_call.1']
    #allocation10 [shape = 'u8[4096]{0}', space=vmem, size = 0x1000, scoped, tag = 'output window, operand 0, single buffered']
    %12 = vsyncpa [#allocation3], 0
    %13 = vsyncpa [#allocation6], 0
    %14 = vsyncpa [#allocation9], 0
    %15 = vsyncpa [#allocation4], 0
    // Predicated region
    $region2: #{tpu_custom_call.1} parent=1 // pred_check
      _
    $region3: #{tpu_custom_call.1} parent=1 // pred_check_branch
      %17 = sbr.rel (0) target = $region5
    $region4: #{tpu_custom_call.1} parent=1 // pred_region
      %19 = vsyncadd [#allocation3], 0
      %s21 = sshll.u32 %s0, 4
      %s22 = int_to_ptr.hbm [resolvable:$true] %s21
      %s23 = sshll.u32 [#allocation2], 4
      %s24 = int_to_ptr.vmem [resolvable:$true] %s23
      %26 = dma.hbm_to_vmem [thread:$0]  %s22, 128, %s24, [#allocation3]
    $region5: #{tpu_custom_call.1} parent=1 // pred_fallthru
      _
    // Predicated region
    $region6: #{tpu_custom_call.1} parent=1 // pred_check
      _
    $region7: #{tpu_custom_call.1} parent=1 // pred_check_branch
      %28 = sbr.rel (0) target = $region9
    $region8: #{tpu_custom_call.1} parent=1 // pred_region
      %30 = vsyncadd [#allocation6], 0
      %s31 = sshll.u32 %s1, 4
      %s32 = int_to_ptr.hbm [resolvable:$true] %s31
      %s33 = sshll.u32 [#allocation5], 4
      %s34 = int_to_ptr.vmem [resolvable:$true] %s33
      %39 = dma.hbm_to_vmem [thread:$0]  %s32, 2048, %s34, [#allocation6], 128, 128, 8
    $region9: #{tpu_custom_call.1} parent=1 // pred_fallthru
      _
    // Predicated region
    $region10: #{tpu_custom_call.1} parent=1 // pred_check
      _
    $region11: #{tpu_custom_call.1} parent=1 // pred_check_branch
      %41 = sbr.rel (0) target = $region13
    $region12: #{tpu_custom_call.1} parent=1 // pred_region
      %43 = vsyncadd [#allocation6], 0
      %s44 = sshll.u32 %s2, 4
      %s45 = int_to_ptr.hbm [resolvable:$true] %s44
      %s46 = sshll.u32 [#allocation7], 4
      %s47 = int_to_ptr.vmem [resolvable:$true] %s46
      %52 = dma.hbm_to_vmem [thread:$0]  %s45, 2048, %s47, [#allocation6], 128, 128, 8
    $region13: #{tpu_custom_call.1} parent=1 // pred_fallthru
      _
    // Predicated region
    $region14: #{tpu_custom_call.1} parent=1 // pred_check
      _
    $region15: #{tpu_custom_call.1} parent=1 // pred_check_branch
      %54 = sbr.rel (0) target = $region17
    $region16: #{tpu_custom_call.1} parent=1 // pred_region
      %56 = vsyncadd [#allocation9], 0
      %s57 = sshll.u32 %s3, 4
      %s58 = int_to_ptr.hbm [resolvable:$true] %s57
      %s59 = sshll.u32 [#allocation8], 4
      %s60 = int_to_ptr.vmem [resolvable:$true] %s59
      %65 = dma.hbm_to_vmem [thread:$0]  %s58, 2048, %s60, [#allocation9], 128, 128, 8
    $region17: #{tpu_custom_call.1} parent=1 // pred_fallthru
      _
    // Predicated region
    $region18: #{tpu_custom_call.1} parent=1 // pred_check
      _
    $region19: #{tpu_custom_call.1} parent=1 // pred_check_branch
      %67 = sbr.rel (0) target = $region21
    $region20: #{tpu_custom_call.1} parent=1 // pred_region
      _
    $region21: #{tpu_custom_call.1} parent=1 // pred_fallthru
      _
    // Predicated region
    $region22: #{tpu_custom_call.1} parent=1 // pred_check
      _
    $region23: #{tpu_custom_call.1} parent=1 // pred_check_branch
      %69 = sbr.rel (0) target = $region25
    $region24: #{tpu_custom_call.1} parent=1 // pred_region
      _
    $region25: #{tpu_custom_call.1} parent=1 // pred_fallthru
      _
    // Predicated region
    $region26: #{tpu_custom_call.1} parent=1 // pred_check
      _
    $region27: #{tpu_custom_call.1} parent=1 // pred_check_branch
      %71 = sbr.rel (0) target = $region29
    $region28: #{tpu_custom_call.1} parent=1 // pred_region
      _
    $region29: #{tpu_custom_call.1} parent=1 // pred_fallthru
      _
    // Predicated region
    $region30: #{tpu_custom_call.1} parent=1 // pred_check
      _
    $region31: #{tpu_custom_call.1} parent=1 // pred_check_branch
      %73 = sbr.rel (0) target = $region33
    $region32: #{tpu_custom_call.1} parent=1 // pred_region
      %75 = dma.done [#allocation3], 128
    $region33: #{tpu_custom_call.1} parent=1 // pred_fallthru
      _
    // Predicated region
    $region34: #{tpu_custom_call.1} parent=1 // pred_check
      _
    $region35: #{tpu_custom_call.1} parent=1 // pred_check_branch
      %77 = sbr.rel (0) target = $region37
    $region36: #{tpu_custom_call.1} parent=1 // pred_region
      %79 = dma.done [#allocation6], 2048
    $region37: #{tpu_custom_call.1} parent=1 // pred_fallthru
      _
    // Predicated region
    $region38: #{tpu_custom_call.1} parent=1 // pred_check
      _
    $region39: #{tpu_custom_call.1} parent=1 // pred_check_branch
      %81 = sbr.rel (0) target = $region41
    $region40: #{tpu_custom_call.1} parent=1 // pred_region
      %83 = dma.done [#allocation6], 2048
    $region41: #{tpu_custom_call.1} parent=1 // pred_fallthru
      _
    // Predicated region
    $region42: #{tpu_custom_call.1} parent=1 // pred_check
      _
    $region43: #{tpu_custom_call.1} parent=1 // pred_check_branch
      %85 = sbr.rel (0) target = $region45
    $region44: #{tpu_custom_call.1} parent=1 // pred_region
      %87 = dma.done [#allocation9], 2048
    $region45: #{tpu_custom_call.1} parent=1 // pred_fallthru
      _
    %p88 = scmp.eq.s32.totalorder 0, 0
    // Predicated region
    $region46: #{tpu_custom_call.1} parent=1 // pred_check
      %p89 = pneg %p88
    $region47: #{tpu_custom_call.1} parent=1 // pred_check_branch
      %91 = sbr.rel (%p89) target = $region49
    $region48: #{tpu_custom_call.1} parent=1 // pred_region
      %92 = vst [vmem:[#allocation10] sm:$0xff] 0.0
    $region49: #{tpu_custom_call.1} parent=1 // pred_fallthru
      _
    %v93 = vld [vmem:[#allocation5] sm:$0xff]
    %v94 = vld [vmem:[#allocation5 + $0x8] sm:$0xff]
    %v95 = vld [vmem:[#allocation5 + $0x10] sm:$0xff]
    %v96 = vld [vmem:[#allocation5 + $0x18] sm:$0xff]
    %v97 = vld [vmem:[#allocation5 + $0x20] sm:$0xff]
    %v98 = vld [vmem:[#allocation5 + $0x28] sm:$0xff]
    %v99 = vld [vmem:[#allocation5 + $0x30] sm:$0xff]
    %v100 = vld [vmem:[#allocation5 + $0x38] sm:$0xff]
    %v101 = vld [vmem:[#allocation5 + $0x40] sm:$0xff]
    %v102 = vld [vmem:[#allocation5 + $0x48] sm:$0xff]
    %v103 = vld [vmem:[#allocation5 + $0x50] sm:$0xff]
    %v104 = vld [vmem:[#allocation5 + $0x58] sm:$0xff]
    %v105 = vld [vmem:[#allocation5 + $0x60] sm:$0xff]
    %v106 = vld [vmem:[#allocation5 + $0x68] sm:$0xff]
    %v107 = vld [vmem:[#allocation5 + $0x70] sm:$0xff]
    %v108 = vld [vmem:[#allocation5 + $0x78] sm:$0xff]
    %v109 = vld [vmem:[#allocation7] sm:$0xff]
    %v110 = vld [vmem:[#allocation7 + $0x8] sm:$0xff]
    %v111 = vld [vmem:[#allocation7 + $0x10] sm:$0xff]
    %v112 = vld [vmem:[#allocation7 + $0x18] sm:$0xff]
    %v113 = vld [vmem:[#allocation7 + $0x20] sm:$0xff]
    %v114 = vld [vmem:[#allocation7 + $0x28] sm:$0xff]
    %v115 = vld [vmem:[#allocation7 + $0x30] sm:$0xff]
    %v116 = vld [vmem:[#allocation7 + $0x38] sm:$0xff]
    %v117 = vld [vmem:[#allocation7 + $0x40] sm:$0xff]
    %v118 = vld [vmem:[#allocation7 + $0x48] sm:$0xff]
    %v119 = vld [vmem:[#allocation7 + $0x50] sm:$0xff]
    %v120 = vld [vmem:[#allocation7 + $0x58] sm:$0xff]
    %v121 = vld [vmem:[#allocation7 + $0x60] sm:$0xff]
    %v122 = vld [vmem:[#allocation7 + $0x68] sm:$0xff]
    %v123 = vld [vmem:[#allocation7 + $0x70] sm:$0xff]
    %v124 = vld [vmem:[#allocation7 + $0x78] sm:$0xff]
    %v125 = vmul.f32 %v109, 0.5
    %v126 = vmul.f32 %v110, 0.5
    %v127 = vmul.f32 %v111, 0.5
    %v128 = vmul.f32 %v112, 0.5
    %v129 = vmul.f32 %v113, 0.5
    %v130 = vmul.f32 %v114, 0.5
    %v131 = vmul.f32 %v115, 0.5
    %v132 = vmul.f32 %v116, 0.5
    %v133 = vmul.f32 %v117, 0.5
    %v134 = vmul.f32 %v118, 0.5
    %v135 = vmul.f32 %v119, 0.5
    %v136 = vmul.f32 %v120, 0.5
    %v137 = vmul.f32 %v121, 0.5
    %v138 = vmul.f32 %v122, 0.5
    %v139 = vmul.f32 %v123, 0.5
    %v140 = vmul.f32 %v124, 0.5
    %v141 = vmul.f32 %v125, 1.442695
    %v142 = vpow.pop %v141
    %v143 = vmul.f32 %v126, 1.442695
    %v144 = vpow.pop %v143
    %v145 = vmul.f32 %v127, 1.442695
    %v146 = vpow.pop %v145
    %v147 = vmul.f32 %v128, 1.442695
    %v148 = vpow.pop %v147
    %v149 = vmul.f32 %v129, 1.442695
    %v150 = vpow.pop %v149
    %v151 = vmul.f32 %v130, 1.442695
    %v152 = vpow.pop %v151
    %v153 = vmul.f32 %v131, 1.442695
    %v154 = vpow.pop %v153
    %v155 = vmul.f32 %v132, 1.442695
    %v156 = vpow.pop %v155
    %v157 = vmul.f32 %v133, 1.442695
    %v158 = vpow.pop %v157
    %v159 = vmul.f32 %v134, 1.442695
    %v160 = vpow.pop %v159
    %v161 = vmul.f32 %v135, 1.442695
    %v162 = vpow.pop %v161
    %v163 = vmul.f32 %v136, 1.442695
    %v164 = vpow.pop %v163
    %v165 = vmul.f32 %v137, 1.442695
    %v166 = vpow.pop %v165
    %v167 = vmul.f32 %v138, 1.442695
    %v168 = vpow.pop %v167
    %v169 = vmul.f32 %v139, 1.442695
    %v170 = vpow.pop %v169
    %v171 = vmul.f32 %v140, 1.442695
    %v172 = vpow.pop %v171
    %v173 = vld [vmem:[#allocation8] sm:$0xff]
    %v174 = vld [vmem:[#allocation8 + $0x8] sm:$0xff]
    %v175 = vld [vmem:[#allocation8 + $0x10] sm:$0xff]
    %v176 = vld [vmem:[#allocation8 + $0x18] sm:$0xff]
    %v177 = vld [vmem:[#allocation8 + $0x20] sm:$0xff]
    %v178 = vld [vmem:[#allocation8 + $0x28] sm:$0xff]
    %v179 = vld [vmem:[#allocation8 + $0x30] sm:$0xff]
    %v180 = vld [vmem:[#allocation8 + $0x38] sm:$0xff]
    %v181 = vld [vmem:[#allocation8 + $0x40] sm:$0xff]
    %v182 = vld [vmem:[#allocation8 + $0x48] sm:$0xff]
    %v183 = vld [vmem:[#allocation8 + $0x50] sm:$0xff]
    %v184 = vld [vmem:[#allocation8 + $0x58] sm:$0xff]
    %v185 = vld [vmem:[#allocation8 + $0x60] sm:$0xff]
    %v186 = vld [vmem:[#allocation8 + $0x68] sm:$0xff]
    %v187 = vld [vmem:[#allocation8 + $0x70] sm:$0xff]
    %v188 = vld [vmem:[#allocation8 + $0x78] sm:$0xff]
    %v189 = vmul.f32 %v142, %v173
    %v190 = vmul.f32 %v144, %v174
    %v191 = vmul.f32 %v146, %v175
    %v192 = vmul.f32 %v148, %v176
    %v193 = vmul.f32 %v150, %v177
    %v194 = vmul.f32 %v152, %v178
    %v195 = vmul.f32 %v154, %v179
    %v196 = vmul.f32 %v156, %v180
    %v197 = vmul.f32 %v158, %v181
    %v198 = vmul.f32 %v160, %v182
    %v199 = vmul.f32 %v162, %v183
    %v200 = vmul.f32 %v164, %v184
    %v201 = vmul.f32 %v166, %v185
    %v202 = vmul.f32 %v168, %v186
    %v203 = vmul.f32 %v170, %v187
    %v204 = vmul.f32 %v172, %v188
    %v205 = vadd.f32 %v93, %v189
    %v206 = vadd.f32 %v94, %v190
    %v207 = vadd.f32 %v95, %v191
    %v208 = vadd.f32 %v96, %v192
    %v209 = vadd.f32 %v97, %v193
    %v210 = vadd.f32 %v98, %v194
    %v211 = vadd.f32 %v99, %v195
    %v212 = vadd.f32 %v100, %v196
    %v213 = vadd.f32 %v101, %v197
    %v214 = vadd.f32 %v102, %v198
    %v215 = vadd.f32 %v103, %v199
    %v216 = vadd.f32 %v104, %v200
    %v217 = vadd.f32 %v105, %v201
    %v218 = vadd.f32 %v106, %v202
    %v219 = vadd.f32 %v107, %v203
    %v220 = vadd.f32 %v108, %v204
    %v221 = vld [vmem:[#allocation10] sm:$0xff]
    %v222 = vld [vmem:[#allocation2] sm:$0xff]
    %223 = vmatpush.msra.mxu0 %v220
    %224 = vmatpush.msra.mxu0 %v219
    %225 = vmatpush.msra.mxu0 %v218
    %226 = vmatpush.msra.mxu0 %v217
    %227 = vmatpush.msra.mxu0 %v216
    %228 = vmatpush.msra.mxu0 %v215
    %229 = vmatpush.msra.mxu0 %v214
    %230 = vmatpush.msra.mxu0 %v213
    %231 = vmatpush.msra.mxu0 %v212
    %232 = vmatpush.msra.mxu0 %v211
    %233 = vmatpush.msra.mxu0 %v210
    %234 = vmatpush.msra.mxu0 %v209
    %235 = vmatpush.msra.mxu0 %v208
    %236 = vmatpush.msra.mxu0 %v207
    %237 = vmatpush.msra.mxu0 %v206
    %238 = vmatpush.msra.mxu0 %v205
    %239 = vmatmul.f32.gmra.mxu0 %v222
    %v240 = vpop.f32.mrf.mxu0
    %v241 = vadd.f32 0.0, %v240
    %242 = vdwg.mxu0
    %v243 = vadd.f32 %v221, %v241
    %244 = vst [vmem:[#allocation10] sm:$0xff] %v243
    // Predicated region
    $region50: #{tpu_custom_call.1} parent=1 // pred_check
      %p245 = pneg %p88
    $region51: #{tpu_custom_call.1} parent=1 // pred_check_branch
      %247 = sbr.rel (%p245) target = $region53
    $region52: #{tpu_custom_call.1} parent=1 // pred_region
      %v248 = vld [vmem:[%s4] sm:$0x1]
      %v249 = vld [vmem:[%s5] sm:$0x1]
      %v250 = vmul.f32 %v249, 0.5
      %v251 = vmul.f32 %v250, 1.442695
      %v252 = vpow.pop %v251
      %v253 = vld [vmem:[%s6] sm:$0x1]
      %v254 = vmul.f32 %v252, %v253
      %v255 = vadd.f32 %v248, %v254
      %v256 = vld [vmem:[#allocation10] sm:$0xff]
      %v258 = vperm.slane %v255, 0
      %v260 = vadd.f32 %v256, %v258
      %261 = vst [vmem:[#allocation10] sm:$0xff] %v260
    $region53: #{tpu_custom_call.1} parent=1 // pred_fallthru
      _
    // Predicated region
    $region54: #{tpu_custom_call.1} parent=1 // pred_check
      _
    $region55: #{tpu_custom_call.1} parent=1 // pred_check_branch
      %263 = sbr.rel (0) target = $region57
    $region56: #{tpu_custom_call.1} parent=1 // pred_region
      %265 = vsyncadd [#allocation4], 0
      %s267 = sshll.u32 [#allocation10], 4
      %s268 = int_to_ptr.vmem [resolvable:$true] %s267
      %s269 = sshll.u32 %s7, 4
      %s270 = int_to_ptr.hbm [resolvable:$true] %s269
      %272 = dma.vmem_to_hbm [thread:$0]  %s268, 128, %s270, [#allocation4]
    $region57: #{tpu_custom_call.1} parent=1 // pred_fallthru
      _
    // Predicated region
    $region58: #{tpu_custom_call.1} parent=1 // pred_check
      _
    $region59: #{tpu_custom_call.1} parent=1 // pred_check_branch
      %274 = sbr.rel (0) target = $region61
    $region60: #{tpu_custom_call.1} parent=1 // pred_region
      %276 = dma.done [#allocation4], 128
    $region61: #{tpu_custom_call.1} parent=1 // pred_fallthru
      _
    %277 = vsyncpa [#allocation3], 1
    %278 = vsyncpa [#allocation6], 1
    %279 = vsyncpa [#allocation9], 1
    %280 = vsyncpa [#allocation4], 1

</llo_original>
